<compile_context>
chip_gen: v7x
topology: tpu7x:2x2x1
jax: 0.10.0
libtpu: 0.0.40
codegen_flags: <defaults>
</compile_context>

<pallas_src>
import jax
import jax.numpy as jnp
from jax.experimental import pallas as pl
from jax.experimental.pallas import tpu as pltpu

WIDERESNET_WIDTH_WANG2023 = 10
IN_FEATURES = 64 * WIDERESNET_WIDTH_WANG2023   # 640
LATENT_DIM = 128
HIDDEN = LATENT_DIM * 3                        # 384


def _head_kernel(x_ref, w1_ref, b1_ref, w2_ref, b2_ref, o_ref):
    # fc1 + ReLU: (TB, 640) @ (640, 384) on the MXU, f32 accumulate.
    h = jnp.dot(x_ref[...], w1_ref[...], preferred_element_type=jnp.float32)
    h = h + b1_ref[...].astype(jnp.float32)      # (TB, HIDDEN) + (1, HIDDEN)
    h = jnp.maximum(h, 0.0)
    # fc2: (TB, 384) @ (384, 128), f32 accumulate.
    y = jnp.dot(h.astype(w2_ref.dtype), w2_ref[...],
                preferred_element_type=jnp.float32)
    y = y + b2_ref[...].astype(jnp.float32)      # (TB, LATENT) + (1, LATENT)
    o_ref[...] = y.astype(o_ref.dtype)


def _round_up(n, m):
    return (n + m - 1) // m * m


def _sublane_multiple(dtype):
    # f32 -> 8 sublanes per vreg, bf16/f16 -> 16 (packed), int8/fp8 -> 32.
    return {4: 8, 2: 16, 1: 32}.get(jnp.dtype(dtype).itemsize, 8)


def wrn2810_head(x, w1, b1, w2, b2, *, block_b=None):
    """WRN2810Head forward: relu(x @ w1 + b1) @ w2 + b2.

    x:  (B, 640)    activations (bf16 preferred; f32 supported)
    w1: (640, 384)  fc1 weight, stored transposed vs. PyTorch's (out, in)
    b1: (1, 384)    fc1 bias, f32, lane-aligned row
    w2: (384, 128)  fc2 weight, stored transposed vs. PyTorch's (out, in)
    b2: (1, 128)    fc2 bias, f32, lane-aligned row
    """
    B = x.shape[0]
    out_dtype = x.dtype
    sub = _sublane_multiple(x.dtype)

    if block_b is None:
        # bf16 gets a bigger tile (half the bytes per row); both choices keep
        # the per-step working set under the 32 MiB scoped-VMEM default on
        # every generation (incl. v7x's 64 MiB physical VMEM).
        block_b = 4096 if jnp.dtype(x.dtype).itemsize <= 2 else 2048

    # At least two grid steps when B is big enough (v7x megacore: both TCs get
    # work); tile rounded to the dtype's sublane multiple and capped at
    # block_b. Tiny batches fall back to a single full-array block.
    tb = max(sub, min(block_b, _round_up(pl.cdiv(B, 2), sub)))
    if tb >= B:
        tb = B                        # full-dim block: always layout-legal
    grid = (pl.cdiv(B, tb),)          # partial last tile handled by masking

    # Advisory cost so XLA can overlap this small head with surrounding ops.
    act_bytes = jnp.dtype(x.dtype).itemsize
    w_bytes = (w1.size * jnp.dtype(w1.dtype).itemsize
               + b1.size * jnp.dtype(b1.dtype).itemsize
               + w2.size * jnp.dtype(w2.dtype).itemsize
               + b2.size * jnp.dtype(b2.dtype).itemsize)
    cost = pl.CostEstimate(
        flops=2 * B * (IN_FEATURES * HIDDEN + HIDDEN * LATENT_DIM),
        transcendentals=0,
        bytes_accessed=(B * IN_FEATURES * act_bytes
                        + B * LATENT_DIM * jnp.dtype(out_dtype).itemsize
                        + w_bytes),
    )

    # Weights / biases: constant block index -> VMEM-resident; single-buffered
    # (no point double-buffering a block that never changes).
    resident = pl.Buffered(1)

    out = pl.pallas_call(
        _head_kernel,
        out_shape=jax.ShapeDtypeStruct((B, LATENT_DIM), out_dtype),
        grid=grid,
        in_specs=[
            # Activations: tiled along batch, pipelined behind the matmuls.
            pl.BlockSpec((tb, IN_FEATURES), lambda i: (i, 0)),
            pl.BlockSpec((IN_FEATURES, HIDDEN), lambda i: (0, 0),
                         pipeline_mode=resident),
            pl.BlockSpec((1, HIDDEN), lambda i: (0, 0),
                         pipeline_mode=resident),
            pl.BlockSpec((HIDDEN, LATENT_DIM), lambda i: (0, 0),
                         pipeline_mode=resident),
            pl.BlockSpec((1, LATENT_DIM), lambda i: (0, 0),
                         pipeline_mode=resident),
        ],
        out_specs=pl.BlockSpec((tb, LATENT_DIM), lambda i: (i, 0)),
        compiler_params=pltpu.CompilerParams(
            dimension_semantics=("parallel",),   # v7x: 2 TCs split the batch
        ),
        cost_estimate=cost,
    )(x, w1, b1, w2, b2)

    return out


def init_params(key, dtype=jnp.bfloat16):
    """Deterministic init mirroring nn.Linear default (uniform +-1/sqrt(fan_in)).

    Weights are returned in `dtype` (bf16 by default); biases stay f32.
    """
    k1, k2, k3, k4 = jax.random.split(key, 4)
    lim1 = 1.0 / (IN_FEATURES ** 0.5)
    lim2 = 1.0 / (HIDDEN ** 0.5)
    # stored as (in, out) == transpose of PyTorch's (out, in)
    w1 = jax.random.uniform(k1, (IN_FEATURES, HIDDEN), jnp.float32, -lim1, lim1)
    b1 = jax.random.uniform(k2, (1, HIDDEN), jnp.float32, -lim1, lim1)
    w2 = jax.random.uniform(k3, (HIDDEN, LATENT_DIM), jnp.float32, -lim2, lim2)
    b2 = jax.random.uniform(k4, (1, LATENT_DIM), jnp.float32, -lim2, lim2)
    return w1.astype(dtype), b1, w2.astype(dtype), b2


def reference(x, w1, b1, w2, b2):
    """Pure-JAX reference with the same accumulate/cast discipline."""
    h = jnp.dot(x, w1, preferred_element_type=jnp.float32) + b1
    h = jnp.maximum(h, 0.0)
    return jnp.dot(h.astype(w2.dtype), w2, preferred_element_type=jnp.float32) + b2


if __name__ == "__main__":
    key = jax.random.PRNGKey(0)
    kx, kx2, kp = jax.random.split(key, 3)

    # Master params / inputs in f32 (reference is always f32).
    B = 4
    x32 = jax.random.normal(kx, (B, IN_FEATURES), jnp.float32)
    w1, b1, w2, b2 = init_params(kp, dtype=jnp.float32)
    ref32 = reference(x32, w1, b1, w2, b2)

    # --- f32 path, single (partial) tile ------------------------------------
    out32 = jax.block_until_ready(wrn2810_head(x32, w1, b1, w2, b2))
    assert out32.shape == (B, LATENT_DIM), out32.shape
    assert jnp.allclose(out32, ref32, atol=2e-3, rtol=2e-3), "f32 mismatch"

    # --- bf16 default path (bf16 x / w1 / w2, f32 biases & accumulate) ------
    x_bf = x32.astype(jnp.bfloat16)
    w1_bf, w2_bf = w1.astype(jnp.bfloat16), w2.astype(jnp.bfloat16)
    out_bf = jax.block_until_ready(wrn2810_head(x_bf, w1_bf, b1, w2_bf, b2))
    assert out_bf.shape == (B, LATENT_DIM)
    assert bool(jnp.all(jnp.isfinite(out_bf.astype(jnp.float32))))
    assert jnp.allclose(out_bf.astype(jnp.float32), ref32, atol=5e-2, rtol=5e-2), \
        "bf16 path drifted too far from f32 reference"

    # --- ragged batch, bf16, multi-tile grid (partial last tile, masked store)
    B2 = 20
    x2 = jax.random.normal(kx2, (B2, IN_FEATURES), jnp.float32)
    ref2 = reference(x2, w1, b1, w2, b2)
    out2 = jax.block_until_ready(
        wrn2810_head(x2.astype(jnp.bfloat16), w1_bf, b1, w2_bf, b2, block_b=16))
    assert out2.shape == (B2, LATENT_DIM), out2.shape
    assert jnp.allclose(out2.astype(jnp.float32), ref2, atol=5e-2, rtol=5e-2), \
        "bf16 ragged/tiled mismatch vs reference"

    # --- ragged batch, f32, 3 grid steps (no host-side padding copy) --------
    out3 = jax.block_until_ready(wrn2810_head(x2, w1, b1, w2, b2, block_b=8))
    assert out3.shape == (B2, LATENT_DIM)
    assert jnp.allclose(out3, ref2, atol=2e-3, rtol=2e-3), "f32 ragged mismatch"

    print("KERNEL_OK")
</pallas_src>

<mosaic_0001>
module attributes {stable_mosaic.version = 11 : i64} {
  func.func @_head_kernel(%arg0: i32, %arg1: memref<4x640xf32, #tpu.memory_space<vmem>>, %arg2: memref<640x384xf32, #tpu.memory_space<vmem>>, %arg3: memref<1x384xf32, #tpu.memory_space<vmem>>, %arg4: memref<384x128xf32, #tpu.memory_space<vmem>>, %arg5: memref<1x128xf32, #tpu.memory_space<vmem>>, %arg6: memref<4x128xf32, #tpu.memory_space<vmem>>) attributes {dimension_semantics = [#tpu.dimension_semantics<parallel>], iteration_bounds = array<i64: 1>, scalar_prefetch = 0 : i64, scratch_operands = 0 : i64, tpu.core_type = #tpu.core_type<tc>, window_params = [{transform_indices = @transform_0, window_bounds = array<i64: 4, 640>}, {pipeline_mode = #tpu.pipeline_mode<synchronous>, transform_indices = @transform_1, window_bounds = array<i64: 640, 384>}, {pipeline_mode = #tpu.pipeline_mode<synchronous>, transform_indices = @transform_2, window_bounds = array<i64: 1, 384>}, {pipeline_mode = #tpu.pipeline_mode<synchronous>, transform_indices = @transform_3, window_bounds = array<i64: 384, 128>}, {pipeline_mode = #tpu.pipeline_mode<synchronous>, transform_indices = @transform_4, window_bounds = array<i64: 1, 128>}, {transform_indices = @transform_5, window_bounds = array<i64: 4, 128>}]} {
    %c0 = arith.constant 0 : index
    %c0_0 = arith.constant 0 : index
    %0 = vector.load %arg1[%c0, %c0_0] : memref<4x640xf32, #tpu.memory_space<vmem>>, vector<4x640xf32>
    %c0_1 = arith.constant 0 : index
    %c0_2 = arith.constant 0 : index
    %1 = vector.load %arg2[%c0_1, %c0_2] : memref<640x384xf32, #tpu.memory_space<vmem>>, vector<640x384xf32>
    %cst = arith.constant dense<0.000000e+00> : vector<4x384xf32>
    %2 = tpu.matmul %0, %1, %cst {dimension_numbers = #tpu.dot_dimension_numbers<[1], [0], [0], [1], [0, 0, 1, 1], [], []>} : vector<4x640xf32>, vector<640x384xf32>, vector<4x384xf32> -> vector<4x384xf32>
    %c0_3 = arith.constant 0 : index
    %c0_4 = arith.constant 0 : index
    %3 = vector.load %arg3[%c0_3, %c0_4] : memref<1x384xf32, #tpu.memory_space<vmem>>, vector<1x384xf32>
    %4 = vector.broadcast %3 : vector<1x384xf32> to vector<4x384xf32>
    %5 = arith.addf %2, %4 : vector<4x384xf32>
    %cst_5 = arith.constant 0.000000e+00 : f32
    %6 = vector.broadcast %cst_5 : f32 to vector<4x384xf32>
    %7 = arith.maximumf %5, %6 : vector<4x384xf32>
    %c0_6 = arith.constant 0 : index
    %c0_7 = arith.constant 0 : index
    %8 = vector.load %arg4[%c0_6, %c0_7] : memref<384x128xf32, #tpu.memory_space<vmem>>, vector<384x128xf32>
    %cst_8 = arith.constant dense<0.000000e+00> : vector<4x128xf32>
    %9 = tpu.matmul %7, %8, %cst_8 {dimension_numbers = #tpu.dot_dimension_numbers<[1], [0], [0], [1], [0, 0, 1, 1], [], []>} : vector<4x384xf32>, vector<384x128xf32>, vector<4x128xf32> -> vector<4x128xf32>
    %c0_9 = arith.constant 0 : index
    %c0_10 = arith.constant 0 : index
    %10 = vector.load %arg5[%c0_9, %c0_10] : memref<1x128xf32, #tpu.memory_space<vmem>>, vector<1x128xf32>
    %11 = vector.broadcast %10 : vector<1x128xf32> to vector<4x128xf32>
    %12 = arith.addf %9, %11 : vector<4x128xf32>
    %c0_11 = arith.constant 0 : index
    %c0_12 = arith.constant 0 : index
    %13 = vector.load %arg6[%c0_11, %c0_12] : memref<4x128xf32, #tpu.memory_space<vmem>>, vector<4x128xf32>
    tpu.vector_store %arg6[%c0_11, %c0_12], %12 {strides = array<i32>} : memref<4x128xf32, #tpu.memory_space<vmem>>, vector<4x128xf32>,
    return
  }
  func.func @transform_0(%arg0: i32) -> (i32, i32) {
    %c0_i32 = arith.constant 0 : i32
    %c0_i32_0 = arith.constant 0 : i32
    return %arg0, %c0_i32 : i32, i32
  }
  func.func @transform_1(%arg0: i32) -> (i32, i32) {
    %c0_i32 = arith.constant 0 : i32
    %c0_i32_0 = arith.constant 0 : i32
    %c0_i32_1 = arith.constant 0 : i32
    return %c0_i32, %c0_i32_0 : i32, i32
  }
  func.func @transform_2(%arg0: i32) -> (i32, i32) {
    %c0_i32 = arith.constant 0 : i32
    %c0_i32_0 = arith.constant 0 : i32
    %c0_i32_1 = arith.constant 0 : i32
    return %c0_i32, %c0_i32_0 : i32, i32
  }
  func.func @transform_3(%arg0: i32) -> (i32, i32) {
    %c0_i32 = arith.constant 0 : i32
    %c0_i32_0 = arith.constant 0 : i32
    %c0_i32_1 = arith.constant 0 : i32
    return %c0_i32, %c0_i32_0 : i32, i32
  }
  func.func @transform_4(%arg0: i32) -> (i32, i32) {
    %c0_i32 = arith.constant 0 : i32
    %c0_i32_0 = arith.constant 0 : i32
    %c0_i32_1 = arith.constant 0 : i32
    return %c0_i32, %c0_i32_0 : i32, i32
  }
  func.func @transform_5(%arg0: i32) -> (i32, i32) {
    %c0_i32 = arith.constant 0 : i32
    %c0_i32_0 = arith.constant 0 : i32
    return %arg0, %c0_i32 : i32, i32
  }
}

</mosaic_0001>

<llo_original>
// kernel: tpu_custom_call.1
$region0: #{tpu_custom_call.1}
  #allocation0 [shape = 'u32[]', space=smem, size = 0x4, offset = 0x4, fixed_abs, tag = 'smem constant byte address 0x4 - core index']
  #allocation1 [shape = 'u32[144,128]{1,0:T(1,128)}', space=vmem, size = 0x12000, scoped, tag = 'internal scratch']
  %s0 = inlined_call_operand.hbm [shape: f32[4,640], index: 0, kind: input, shape index: {}]
  %s1 = inlined_call_operand.hbm [shape: f32[640,384], index: 1, kind: input, shape index: {}]
  %s2 = inlined_call_operand.vmem [shape: f32[1,384], index: 2, kind: input, shape index: {}]
  %s3 = inlined_call_operand.hbm [shape: f32[384,128], index: 3, kind: input, shape index: {}]
  %s4 = inlined_call_operand.vmem [shape: f32[1,128], index: 4, kind: input, shape index: {}]
  %s5 = inlined_call_operand.hbm [shape: f32[4,128], index: 5, kind: output, shape index: {}]
  %s6 = sld [smem:[#allocation0]]
  $region42: #{tpu_custom_call.1} parent=0
    _
  %s8 = ssub.s32 1, %s6
  %s9 = scalar_select 0, %s8, %s6
  $region1: #{tpu_custom_call.1} parent=0
    #allocation2 [shape = 'u8[10240]{0}', space=vmem, size = 0x2800, scoped, tag = 'input window, operand 0, single buffered']
    #allocation3 [shape = 's32[1]{0}', space=sflag, size = 0x4, scoped, tag = 'scoped memory for tpu_custom_call.1']
    #allocation4 [shape = 's32[1]{0}', space=sflag, size = 0x4, scoped, tag = 'scoped memory for tpu_custom_call.1']
    #allocation5 [shape = 'u8[983040]{0}', space=vmem, size = 0xf0000, scoped, tag = 'input window, operand 1, single buffered']
    #allocation6 [shape = 's32[1]{0}', space=sflag, size = 0x4, scoped, tag = 'scoped memory for tpu_custom_call.1']
    #allocation7 [shape = 'u8[196608]{0}', space=vmem, size = 0x30000, scoped, tag = 'input window, operand 3, single buffered']
    #allocation8 [shape = 'u8[2048]{0}', space=vmem, size = 0x800, scoped, tag = 'output window, operand 0, single buffered']
    %10 = vsyncpa [#allocation3], 0
    %11 = vsyncpa [#allocation6], 0
    %12 = vsyncpa [#allocation4], 0
    // Predicated region
    $region2: #{tpu_custom_call.1} parent=1 // pred_check
      _
    $region3: #{tpu_custom_call.1} parent=1 // pred_check_branch
      %14 = sbr.rel (0) target = $region5
    $region4: #{tpu_custom_call.1} parent=1 // pred_region
      %s16 = ssub.s32 320, 320
      %17 = vsyncadd [#allocation3], %s16
      %s19 = sshll.u32 [#allocation2], 4
      %s20 = int_to_ptr.vmem [resolvable:$true] %s19
      %22 = dma.hbm_to_vmem [thread:$0]  %s0, 320, %s20, [#allocation3]
    $region5: #{tpu_custom_call.1} parent=1 // pred_fallthru
      _
    // Predicated region
    $region6: #{tpu_custom_call.1} parent=1 // pred_check
      _
    $region7: #{tpu_custom_call.1} parent=1 // pred_check_branch
      %24 = sbr.rel (0) target = $region9
    $region8: #{tpu_custom_call.1} parent=1 // pred_region
      %s26 = ssub.s32 30720, 30720
      %27 = vsyncadd [#allocation6], %s26
      %s28 = sshll.u32 [#allocation5], 4
      %s29 = int_to_ptr.vmem [resolvable:$true] %s28
      %34 = dma.hbm_to_vmem [thread:$0]  %s1, 30720, %s29, [#allocation6], 384, 384, 24
    $region9: #{tpu_custom_call.1} parent=1 // pred_fallthru
      _
    // Predicated region
    $region10: #{tpu_custom_call.1} parent=1 // pred_check
      _
    $region11: #{tpu_custom_call.1} parent=1 // pred_check_branch
      %36 = sbr.rel (0) target = $region13
    $region12: #{tpu_custom_call.1} parent=1 // pred_region
      _
    $region13: #{tpu_custom_call.1} parent=1 // pred_fallthru
      _
    // Predicated region
    $region14: #{tpu_custom_call.1} parent=1 // pred_check
      _
    $region15: #{tpu_custom_call.1} parent=1 // pred_check_branch
      %38 = sbr.rel (0) target = $region17
    $region16: #{tpu_custom_call.1} parent=1 // pred_region
      %s40 = ssub.s32 6144, 6144
      %41 = vsyncadd [#allocation6], %s40
      %s42 = sshll.u32 [#allocation7], 4
      %s43 = int_to_ptr.vmem [resolvable:$true] %s42
      %48 = dma.hbm_to_vmem [thread:$0]  %s3, 6144, %s43, [#allocation6], 128, 128, 8
    $region17: #{tpu_custom_call.1} parent=1 // pred_fallthru
      _
    // Predicated region
    $region18: #{tpu_custom_call.1} parent=1 // pred_check
      _
    $region19: #{tpu_custom_call.1} parent=1 // pred_check_branch
      %50 = sbr.rel (0) target = $region21
    $region20: #{tpu_custom_call.1} parent=1 // pred_region
      _
    $region21: #{tpu_custom_call.1} parent=1 // pred_fallthru
      _
    // Predicated region
    $region22: #{tpu_custom_call.1} parent=1 // pred_check
      _
    $region23: #{tpu_custom_call.1} parent=1 // pred_check_branch
      %52 = sbr.rel (0) target = $region25
    $region24: #{tpu_custom_call.1} parent=1 // pred_region
      %53 = dma.done [#allocation3], 320
    $region25: #{tpu_custom_call.1} parent=1 // pred_fallthru
      _
    // Predicated region
    $region26: #{tpu_custom_call.1} parent=1 // pred_check
      _
    $region27: #{tpu_custom_call.1} parent=1 // pred_check_branch
      %55 = sbr.rel (0) target = $region29
    $region28: #{tpu_custom_call.1} parent=1 // pred_region
      %56 = dma.done [#allocation6], 30720
    $region29: #{tpu_custom_call.1} parent=1 // pred_fallthru
      _
    // Predicated region
    $region30: #{tpu_custom_call.1} parent=1 // pred_check
      _
    $region31: #{tpu_custom_call.1} parent=1 // pred_check_branch
      %58 = sbr.rel (0) target = $region33
    $region32: #{tpu_custom_call.1} parent=1 // pred_region
      %59 = dma.done [#allocation6], 6144
    $region33: #{tpu_custom_call.1} parent=1 // pred_fallthru
      _
    %v60 = vld [vmem:[#allocation2] sm:$0xff]
    %v61 = vld [vmem:[#allocation2 + $0x8] sm:$0xff]
    %v62 = vld [vmem:[#allocation2 + $0x10] sm:$0xf]
    %v63 = vld [vmem:[#allocation5] sm:$0xff]
    %v64 = vld [vmem:[#allocation5 + $0x8] sm:$0xff]
    %v65 = vld [vmem:[#allocation5 + $0x10] sm:$0xff]
    %v66 = vld [vmem:[#allocation5 + $0x18] sm:$0xff]
    %v67 = vld [vmem:[#allocation5 + $0x20] sm:$0xff]
    %v68 = vld [vmem:[#allocation5 + $0x28] sm:$0xff]
    %v69 = vld [vmem:[#allocation5 + $0x30] sm:$0xff]
    %v70 = vld [vmem:[#allocation5 + $0x38] sm:$0xff]
    %v71 = vld [vmem:[#allocation5 + $0x40] sm:$0xff]
    %v72 = vld [vmem:[#allocation5 + $0x48] sm:$0xff]
    %v73 = vld [vmem:[#allocation5 + $0x50] sm:$0xff]
    %v74 = vld [vmem:[#allocation5 + $0x58] sm:$0xff]
    %v75 = vld [vmem:[#allocation5 + $0x60] sm:$0xff]
    %v76 = vld [vmem:[#allocation5 + $0x68] sm:$0xff]
    %v77 = vld [vmem:[#allocation5 + $0x70] sm:$0xff]
    %v78 = vld [vmem:[#allocation5 + $0x78] sm:$0xff]
    %v79 = vld [vmem:[#allocation5 + $0x80] sm:$0xff]
    %v80 = vld [vmem:[#allocation5 + $0x88] sm:$0xff]
    %v81 = vld [vmem:[#allocation5 + $0x90] sm:$0xff]
    %v82 = vld [vmem:[#allocation5 + $0x98] sm:$0xff]
    %v83 = vld [vmem:[#allocation5 + $0xa0] sm:$0xff]
    %v84 = vld [vmem:[#allocation5 + $0xa8] sm:$0xff]
    %v85 = vld [vmem:[#allocation5 + $0xb0] sm:$0xff]
    %v86 = vld [vmem:[#allocation5 + $0xb8] sm:$0xff]
    %v87 = vld [vmem:[#allocation5 + $0xc0] sm:$0xff]
    %v88 = vld [vmem:[#allocation5 + $0xc8] sm:$0xff]
    %v89 = vld [vmem:[#allocation5 + $0xd0] sm:$0xff]
    %v90 = vld [vmem:[#allocation5 + $0xd8] sm:$0xff]
    %v91 = vld [vmem:[#allocation5 + $0xe0] sm:$0xff]
    %v92 = vld [vmem:[#allocation5 + $0xe8] sm:$0xff]
    %v93 = vld [vmem:[#allocation5 + $0xf0] sm:$0xff]
    %v94 = vld [vmem:[#allocation5 + $0xf8] sm:$0xff]
    %v95 = vld [vmem:[#allocation5 + $0x100] sm:$0xff]
    %v96 = vld [vmem:[#allocation5 + $0x108] sm:$0xff]
    %v97 = vld [vmem:[#allocation5 + $0x110] sm:$0xff]
    %v98 = vld [vmem:[#allocation5 + $0x118] sm:$0xff]
    %v99 = vld [vmem:[#allocation5 + $0x120] sm:$0xff]
    %v100 = vld [vmem:[#allocation5 + $0x128] sm:$0xff]
    %v101 = vld [vmem:[#allocation5 + $0x130] sm:$0xff]
    %v102 = vld [vmem:[#allocation5 + $0x138] sm:$0xff]
    %v103 = vld [vmem:[#allocation5 + $0x140] sm:$0xff]
    %v104 = vld [vmem:[#allocation5 + $0x148] sm:$0xff]
    %v105 = vld [vmem:[#allocation5 + $0x150] sm:$0xff]
    %v106 = vld [vmem:[#allocation5 + $0x158] sm:$0xff]
    %v107 = vld [vmem:[#allocation5 + $0x160] sm:$0xff]
    %v108 = vld [vmem:[#allocation5 + $0x168] sm:$0xff]
    %v109 = vld [vmem:[#allocation5 + $0x170] sm:$0xff]
    %v110 = vld [vmem:[#allocation5 + $0x178] sm:$0xff]
    %v111 = vld [vmem:[#allocation5 + $0x180] sm:$0xff]
    %v112 = vld [vmem:[#allocation5 + $0x188] sm:$0xff]
    %v113 = vld [vmem:[#allocation5 + $0x190] sm:$0xff]
    %v114 = vld [vmem:[#allocation5 + $0x198] sm:$0xff]
    %v115 = vld [vmem:[#allocation5 + $0x1a0] sm:$0xff]
    %v116 = vld [vmem:[#allocation5 + $0x1a8] sm:$0xff]
    %v117 = vld [vmem:[#allocation5 + $0x1b0] sm:$0xff]
    %v118 = vld [vmem:[#allocation5 + $0x1b8] sm:$0xff]
    %v119 = vld [vmem:[#allocation5 + $0x1c0] sm:$0xff]
    %v120 = vld [vmem:[#allocation5 + $0x1c8] sm:$0xff]
    %v121 = vld [vmem:[#allocation5 + $0x1d0] sm:$0xff]
    %v122 = vld [vmem:[#allocation5 + $0x1d8] sm:$0xff]
    %v123 = vld [vmem:[#allocation5 + $0x1e0] sm:$0xff]
    %v124 = vld [vmem:[#allocation5 + $0x1e8] sm:$0xff]
    %v125 = vld [vmem:[#allocation5 + $0x1f0] sm:$0xff]
    %v126 = vld [vmem:[#allocation5 + $0x1f8] sm:$0xff]
    %v127 = vld [vmem:[#allocation5 + $0x200] sm:$0xff]
    %v128 = vld [vmem:[#allocation5 + $0x208] sm:$0xff]
    %v129 = vld [vmem:[#allocation5 + $0x210] sm:$0xff]
    %v130 = vld [vmem:[#allocation5 + $0x218] sm:$0xff]
    %v131 = vld [vmem:[#allocation5 + $0x220] sm:$0xff]
    %v132 = vld [vmem:[#allocation5 + $0x228] sm:$0xff]
    %v133 = vld [vmem:[#allocation5 + $0x230] sm:$0xff]
    %v134 = vld [vmem:[#allocation5 + $0x238] sm:$0xff]
    %v135 = vld [vmem:[#allocation5 + $0x240] sm:$0xff]
    %v136 = vld [vmem:[#allocation5 + $0x248] sm:$0xff]
    %v137 = vld [vmem:[#allocation5 + $0x250] sm:$0xff]
    %v138 = vld [vmem:[#allocation5 + $0x258] sm:$0xff]
    %v139 = vld [vmem:[#allocation5 + $0x260] sm:$0xff]
    %v140 = vld [vmem:[#allocation5 + $0x268] sm:$0xff]
    %v141 = vld [vmem:[#allocation5 + $0x270] sm:$0xff]
    %v142 = vld [vmem:[#allocation5 + $0x278] sm:$0xff]
    %v143 = vld [vmem:[#allocation5 + $0x280] sm:$0xff]
    %v144 = vld [vmem:[#allocation5 + $0x288] sm:$0xff]
    %v145 = vld [vmem:[#allocation5 + $0x290] sm:$0xff]
    %v146 = vld [vmem:[#allocation5 + $0x298] sm:$0xff]
    %v147 = vld [vmem:[#allocation5 + $0x2a0] sm:$0xff]
    %v148 = vld [vmem:[#allocation5 + $0x2a8] sm:$0xff]
    %v149 = vld [vmem:[#allocation5 + $0x2b0] sm:$0xff]
    %v150 = vld [vmem:[#allocation5 + $0x2b8] sm:$0xff]
    %v151 = vld [vmem:[#allocation5 + $0x2c0] sm:$0xff]
    %v152 = vld [vmem:[#allocation5 + $0x2c8] sm:$0xff]
    %v153 = vld [vmem:[#allocation5 + $0x2d0] sm:$0xff]
    %v154 = vld [vmem:[#allocation5 + $0x2d8] sm:$0xff]
    %v155 = vld [vmem:[#allocation5 + $0x2e0] sm:$0xff]
    %v156 = vld [vmem:[#allocation5 + $0x2e8] sm:$0xff]
    %v157 = vld [vmem:[#allocation5 + $0x2f0] sm:$0xff]
    %v158 = vld [vmem:[#allocation5 + $0x2f8] sm:$0xff]
    %v159 = vld [vmem:[#allocation5 + $0x300] sm:$0xff]
    %v160 = vld [vmem:[#allocation5 + $0x308] sm:$0xff]
    %v161 = vld [vmem:[#allocation5 + $0x310] sm:$0xff]
    %v162 = vld [vmem:[#allocation5 + $0x318] sm:$0xff]
    %v163 = vld [vmem:[#allocation5 + $0x320] sm:$0xff]
    %v164 = vld [vmem:[#allocation5 + $0x328] sm:$0xff]
    %v165 = vld [vmem:[#allocation5 + $0x330] sm:$0xff]
    %v166 = vld [vmem:[#allocation5 + $0x338] sm:$0xff]
    %v167 = vld [vmem:[#allocation5 + $0x340] sm:$0xff]
    %v168 = vld [vmem:[#allocation5 + $0x348] sm:$0xff]
    %v169 = vld [vmem:[#allocation5 + $0x350] sm:$0xff]
    %v170 = vld [vmem:[#allocation5 + $0x358] sm:$0xff]
    %v171 = vld [vmem:[#allocation5 + $0x360] sm:$0xff]
    %v172 = vld [vmem:[#allocation5 + $0x368] sm:$0xff]
    %v173 = vld [vmem:[#allocation5 + $0x370] sm:$0xff]
    %v174 = vld [vmem:[#allocation5 + $0x378] sm:$0xff]
    %v175 = vld [vmem:[#allocation5 + $0x380] sm:$0xff]
    %v176 = vld [vmem:[#allocation5 + $0x388] sm:$0xff]
    %v177 = vld [vmem:[#allocation5 + $0x390] sm:$0xff]
    %v178 = vld [vmem:[#allocation5 + $0x398] sm:$0xff]
    %v179 = vld [vmem:[#allocation5 + $0x3a0] sm:$0xff]
    %v180 = vld [vmem:[#allocation5 + $0x3a8] sm:$0xff]
    %v181 = vld [vmem:[#allocation5 + $0x3b0] sm:$0xff]
    %v182 = vld [vmem:[#allocation5 + $0x3b8] sm:$0xff]
    %v183 = vld [vmem:[#allocation5 + $0x3c0] sm:$0xff]
    %v184 = vld [vmem:[#allocation5 + $0x3c8] sm:$0xff]
    %v185 = vld [vmem:[#allocation5 + $0x3d0] sm:$0xff]
    %v186 = vld [vmem:[#allocation5 + $0x3d8] sm:$0xff]
    %v187 = vld [vmem:[#allocation5 + $0x3e0] sm:$0xff]
    %v188 = vld [vmem:[#allocation5 + $0x3e8] sm:$0xff]
    %v189 = vld [vmem:[#allocation5 + $0x3f0] sm:$0xff]
    %v190 = vld [vmem:[#allocation5 + $0x3f8] sm:$0xff]
    %v191 = vld [vmem:[#allocation5 + $0x400] sm:$0xff]
    %v192 = vld [vmem:[#allocation5 + $0x408] sm:$0xff]
    %v193 = vld [vmem:[#allocation5 + $0x410] sm:$0xff]
    %v194 = vld [vmem:[#allocation5 + $0x418] sm:$0xff]
    %v195 = vld [vmem:[#allocation5 + $0x420] sm:$0xff]
    %v196 = vld [vmem:[#allocation5 + $0x428] sm:$0xff]
    %v197 = vld [vmem:[#allocation5 + $0x430] sm:$0xff]
    %v198 = vld [vmem:[#allocation5 + $0x438] sm:$0xff]
    %v199 = vld [vmem:[#allocation5 + $0x440] sm:$0xff]
    %v200 = vld [vmem:[#allocation5 + $0x448] sm:$0xff]
    %v201 = vld [vmem:[#allocation5 + $0x450] sm:$0xff]
    %v202 = vld [vmem:[#allocation5 + $0x458] sm:$0xff]
    %v203 = vld [vmem:[#allocation5 + $0x460] sm:$0xff]
    %v204 = vld [vmem:[#allocation5 + $0x468] sm:$0xff]
    %v205 = vld [vmem:[#allocation5 + $0x470] sm:$0xff]
    %v206 = vld [vmem:[#allocation5 + $0x478] sm:$0xff]
    %v207 = vld [vmem:[#allocation5 + $0x480] sm:$0xff]
    %v208 = vld [vmem:[#allocation5 + $0x488] sm:$0xff]
    %v209 = vld [vmem:[#allocation5 + $0x490] sm:$0xff]
    %v210 = vld [vmem:[#allocation5 + $0x498] sm:$0xff]
    %v211 = vld [vmem:[#allocation5 + $0x4a0] sm:$0xff]
    %v212 = vld [vmem:[#allocation5 + $0x4a8] sm:$0xff]
    %v213 = vld [vmem:[#allocation5 + $0x4b0] sm:$0xff]
    %v214 = vld [vmem:[#allocation5 + $0x4b8] sm:$0xff]
    %v215 = vld [vmem:[#allocation5 + $0x4c0] sm:$0xff]
    %v216 = vld [vmem:[#allocation5 + $0x4c8] sm:$0xff]
    %v217 = vld [vmem:[#allocation5 + $0x4d0] sm:$0xff]
    %v218 = vld [vmem:[#allocation5 + $0x4d8] sm:$0xff]
    %v219 = vld [vmem:[#allocation5 + $0x4e0] sm:$0xff]
    %v220 = vld [vmem:[#allocation5 + $0x4e8] sm:$0xff]
    %v221 = vld [vmem:[#allocation5 + $0x4f0] sm:$0xff]
    %v222 = vld [vmem:[#allocation5 + $0x4f8] sm:$0xff]
    %v223 = vld [vmem:[#allocation5 + $0x500] sm:$0xff]
    %v224 = vld [vmem:[#allocation5 + $0x508] sm:$0xff]
    %v225 = vld [vmem:[#allocation5 + $0x510] sm:$0xff]
    %v226 = vld [vmem:[#allocation5 + $0x518] sm:$0xff]
    %v227 = vld [vmem:[#allocation5 + $0x520] sm:$0xff]
    %v228 = vld [vmem:[#allocation5 + $0x528] sm:$0xff]
    %v229 = vld [vmem:[#allocation5 + $0x530] sm:$0xff]
    %v230 = vld [vmem:[#allocation5 + $0x538] sm:$0xff]
    %v231 = vld [vmem:[#allocation5 + $0x540] sm:$0xff]
    %v232 = vld [vmem:[#allocation5 + $0x548] sm:$0xff]
    %v233 = vld [vmem:[#allocation5 + $0x550] sm:$0xff]
    %v234 = vld [vmem:[#allocation5 + $0x558] sm:$0xff]
    %v235 = vld [vmem:[#allocation5 + $0x560] sm:$0xff]
    %v236 = vld [vmem:[#allocation5 + $0x568] sm:$0xff]
    %v237 = vld [vmem:[#allocation5 + $0x570] sm:$0xff]
    %v238 = vld [vmem:[#allocation5 + $0x578] sm:$0xff]
    %v239 = vld [vmem:[#allocation5 + $0x580] sm:$0xff]
    %v240 = vld [vmem:[#allocation5 + $0x588] sm:$0xff]
    %v241 = vld [vmem:[#allocation5 + $0x590] sm:$0xff]
    %v242 = vld [vmem:[#allocation5 + $0x598] sm:$0xff]
    %v243 = vld [vmem:[#allocation5 + $0x5a0] sm:$0xff]
    %v244 = vld [vmem:[#allocation5 + $0x5a8] sm:$0xff]
    %v245 = vld [vmem:[#allocation5 + $0x5b0] sm:$0xff]
    %v246 = vld [vmem:[#allocation5 + $0x5b8] sm:$0xff]
    %v247 = vld [vmem:[#allocation5 + $0x5c0] sm:$0xff]
    %v248 = vld [vmem:[#allocation5 + $0x5c8] sm:$0xff]
    %v249 = vld [vmem:[#allocation5 + $0x5d0] sm:$0xff]
    %v250 = vld [vmem:[#allocation5 + $0x5d8] sm:$0xff]
    %v251 = vld [vmem:[#allocation5 + $0x5e0] sm:$0xff]
    %v252 = vld [vmem:[#allocation5 + $0x5e8] sm:$0xff]
    %v253 = vld [vmem:[#allocation5 + $0x5f0] sm:$0xff]
    %v254 = vld [vmem:[#allocation5 + $0x5f8] sm:$0xff]
    %v255 = vld [vmem:[#allocation5 + $0x600] sm:$0xff]
    %v256 = vld [vmem:[#allocation5 + $0x608] sm:$0xff]
    %v257 = vld [vmem:[#allocation5 + $0x610] sm:$0xff]
    %v258 = vld [vmem:[#allocation5 + $0x618] sm:$0xff]
    %v259 = vld [vmem:[#allocation5 + $0x620] sm:$0xff]
    %v260 = vld [vmem:[#allocation5 + $0x628] sm:$0xff]
    %v261 = vld [vmem:[#allocation5 + $0x630] sm:$0xff]
    %v262 = vld [vmem:[#allocation5 + $0x638] sm:$0xff]
    %v263 = vld [vmem:[#allocation5 + $0x640] sm:$0xff]
    %v264 = vld [vmem:[#allocation5 + $0x648] sm:$0xff]
    %v265 = vld [vmem:[#allocation5 + $0x650] sm:$0xff]
    %v266 = vld [vmem:[#allocation5 + $0x658] sm:$0xff]
    %v267 = vld [vmem:[#allocation5 + $0x660] sm:$0xff]
    %v268 = vld [vmem:[#allocation5 + $0x668] sm:$0xff]
    %v269 = vld [vmem:[#allocation5 + $0x670] sm:$0xff]
    %v270 = vld [vmem:[#allocation5 + $0x678] sm:$0xff]
    %v271 = vld [vmem:[#allocation5 + $0x680] sm:$0xff]
    %v272 = vld [vmem:[#allocation5 + $0x688] sm:$0xff]
    %v273 = vld [vmem:[#allocation5 + $0x690] sm:$0xff]
    %v274 = vld [vmem:[#allocation5 + $0x698] sm:$0xff]
    %v275 = vld [vmem:[#allocation5 + $0x6a0] sm:$0xff]
    %v276 = vld [vmem:[#allocation5 + $0x6a8] sm:$0xff]
    %v277 = vld [vmem:[#allocation5 + $0x6b0] sm:$0xff]
    %v278 = vld [vmem:[#allocation5 + $0x6b8] sm:$0xff]
    %v279 = vld [vmem:[#allocation5 + $0x6c0] sm:$0xff]
    %v280 = vld [vmem:[#allocation5 + $0x6c8] sm:$0xff]
    %v281 = vld [vmem:[#allocation5 + $0x6d0] sm:$0xff]
    %v282 = vld [vmem:[#allocation5 + $0x6d8] sm:$0xff]
    %v283 = vld [vmem:[#allocation5 + $0x6e0] sm:$0xff]
    %v284 = vld [vmem:[#allocation5 + $0x6e8] sm:$0xff]
    %v285 = vld [vmem:[#allocation5 + $0x6f0] sm:$0xff]
    %v286 = vld [vmem:[#allocation5 + $0x6f8] sm:$0xff]
    %v287 = vld [vmem:[#allocation5 + $0x700] sm:$0xff]
    %v288 = vld [vmem:[#allocation5 + $0x708] sm:$0xff]
    %v289 = vld [vmem:[#allocation5 + $0x710] sm:$0xff]
    %v290 = vld [vmem:[#allocation5 + $0x718] sm:$0xff]
    %v291 = vld [vmem:[#allocation5 + $0x720] sm:$0xff]
    %v292 = vld [vmem:[#allocation5 + $0x728] sm:$0xff]
    %v293 = vld [vmem:[#allocation5 + $0x730] sm:$0xff]
    %v294 = vld [vmem:[#allocation5 + $0x738] sm:$0xff]
    %v295 = vld [vmem:[#allocation5 + $0x740] sm:$0xff]
    %v296 = vld [vmem:[#allocation5 + $0x748] sm:$0xff]
    %v297 = vld [vmem:[#allocation5 + $0x750] sm:$0xff]
    %v298 = vld [vmem:[#allocation5 + $0x758] sm:$0xff]
    %v299 = vld [vmem:[#allocation5 + $0x760] sm:$0xff]
    %v300 = vld [vmem:[#allocation5 + $0x768] sm:$0xff]
    %v301 = vld [vmem:[#allocation5 + $0x770] sm:$0xff]
    %v302 = vld [vmem:[#allocation5 + $0x778] sm:$0xff]
    %v303 = vld [vmem:[%s2] sm:$0x7]
    %v305 = vlaneseq
    %v306 = vshrl.u32 %v305, 7
    %v307 = vsub.s32 0, %v306
    %v308 = vrot.slane %v303, %v307
    %v309 = vlaneseq
    %v310 = vshrl.u32 %v309, 7
    %v311 = vsub.s32 1, %v310
    %v312 = vrot.slane %v303, %v311
    %v313 = vlaneseq
    %v314 = vshrl.u32 %v313, 7
    %v315 = vsub.s32 2, %v314
    %v316 = vrot.slane %v303, %v315
    %v322 = vcombine.high %v60, %v60
    %v323 = vcombine.high %v61, %v61
    %326 = vmatprep.subr.mxu0 %v64
    %327 = vmatpush1.msra.mxu0 %v63
    %328 = vmatprep.subr.mxu0 %v67
    %329 = vmatpush1.msra.mxu0 %v66
    %330 = vmatprep.subr.mxu0 %v70
    %331 = vmatpush1.msra.mxu0 %v69
    %332 = vmatprep.subr.mxu0 %v73
    %333 = vmatpush1.msra.mxu0 %v72
    %334 = vmatprep.subr.mxu0 %v76
    %335 = vmatpush1.msra.mxu0 %v75
    %336 = vmatprep.subr.mxu0 %v79
    %337 = vmatpush1.msra.mxu0 %v78
    %338 = vmatprep.subr.mxu0 %v82
    %339 = vmatpush1.msra.mxu0 %v81
    %340 = vmatprep.subr.mxu0 %v85
    %341 = vmatpush1.msra.mxu0 %v84
    %342 = vmatprep.subr.mxu0 %v88
    %343 = vmatpush1.msra.mxu0 %v87
    %344 = vmatprep.subr.mxu0 %v91
    %345 = vmatpush1.msra.mxu0 %v90
    %346 = vmatprep.subr.mxu0 %v94
    %347 = vmatpush1.msra.mxu0 %v93
    %348 = vmatprep.subr.mxu0 %v97
    %349 = vmatpush1.msra.mxu0 %v96
    %350 = vmatprep.subr.mxu0 %v100
    %351 = vmatpush1.msra.mxu0 %v99
    %352 = vmatprep.subr.mxu0 %v103
    %353 = vmatpush1.msra.mxu0 %v102
    %354 = vmatprep.subr.mxu0 %v106
    %355 = vmatpush1.msra.mxu0 %v105
    %356 = vmatprep.subr.mxu0 %v109
    %357 = vmatpush1.msra.mxu0 %v108
    %358 = vmatprep.subr.mxu0 %v112
    %359 = vmatpush1.msra.mxu0 %v111
    %360 = vmatprep.subr.mxu0 %v115
    %361 = vmatpush1.msra.mxu0 %v114
    %362 = vmatprep.subr.mxu0 %v118
    %363 = vmatpush1.msra.mxu0 %v117
    %364 = vmatprep.subr.mxu0 %v121
    %365 = vmatpush1.msra.mxu0 %v120
    %366 = vmatprep.subr.mxu0 %v124
    %367 = vmatpush1.msra.mxu0 %v123
    %368 = vmatprep.subr.mxu0 %v127
    %369 = vmatpush1.msra.mxu0 %v126
    %370 = vmatprep.subr.mxu0 %v130
    %371 = vmatpush1.msra.mxu0 %v129
    %372 = vmatprep.subr.mxu0 %v133
    %373 = vmatpush1.msra.mxu0 %v132
    %374 = vmatprep.subr.mxu0 %v136
    %375 = vmatpush1.msra.mxu0 %v135
    %376 = vmatprep.subr.mxu0 %v139
    %377 = vmatpush1.msra.mxu0 %v138
    %378 = vmatprep.subr.mxu0 %v142
    %379 = vmatpush1.msra.mxu0 %v141
    %380 = vmatprep.subr.mxu0 %v145
    %381 = vmatpush1.msra.mxu0 %v144
    %382 = vmatprep.subr.mxu0 %v148
    %383 = vmatpush1.msra.mxu0 %v147
    %384 = vmatprep.subr.mxu0 %v151
    %385 = vmatpush1.msra.mxu0 %v150
    %386 = vmatprep.subr.mxu0 %v154
    %387 = vmatpush1.msra.mxu0 %v153
    %388 = vmatprep.subr.mxu0 %v157
    %389 = vmatpush1.msra.mxu0 %v156
    %390 = vmatprep.mubr.f32.mxu0 %v322
    %391 = vmatmul.mubr.f32.gmra.mrb[0].mxu0 %v60
    %v392 = vpop.f32.mrb[0].mxu0
    %v393 = vadd.f32 %v308, %v392
    %v394 = vpop.f32.mrb[0].mxu0
    %v395 = vadd.f32 %v312, %v394
    %396 = vdwg.mxu0
    %397 = vmatprep.subr.mxu0 %v160
    %398 = vmatpush1.msra.mxu0 %v159
    %399 = vmatprep.subr.mxu0 %v163
    %400 = vmatpush1.msra.mxu0 %v162
    %401 = vmatprep.subr.mxu0 %v166
    %402 = vmatpush1.msra.mxu0 %v165
    %403 = vmatprep.subr.mxu0 %v169
    %404 = vmatpush1.msra.mxu0 %v168
    %405 = vmatprep.subr.mxu0 %v172
    %406 = vmatpush1.msra.mxu0 %v171
    %407 = vmatprep.subr.mxu0 %v175
    %408 = vmatpush1.msra.mxu0 %v174
    %409 = vmatprep.subr.mxu0 %v178
    %410 = vmatpush1.msra.mxu0 %v177
    %411 = vmatprep.subr.mxu0 %v181
    %412 = vmatpush1.msra.mxu0 %v180
    %413 = vmatprep.subr.mxu0 %v184
    %414 = vmatpush1.msra.mxu0 %v183
    %415 = vmatprep.subr.mxu0 %v187
    %416 = vmatpush1.msra.mxu0 %v186
    %417 = vmatprep.subr.mxu0 %v190
    %418 = vmatpush1.msra.mxu0 %v189
    %419 = vmatprep.subr.mxu0 %v193
    %420 = vmatpush1.msra.mxu0 %v192
    %421 = vmatprep.subr.mxu0 %v196
    %422 = vmatpush1.msra.mxu0 %v195
    %423 = vmatprep.subr.mxu0 %v199
    %424 = vmatpush1.msra.mxu0 %v198
    %425 = vmatprep.subr.mxu0 %v202
    %426 = vmatpush1.msra.mxu0 %v201
    %427 = vmatprep.subr.mxu0 %v205
    %428 = vmatpush1.msra.mxu0 %v204
    %429 = vmatprep.subr.mxu0 %v208
    %430 = vmatpush1.msra.mxu0 %v207
    %431 = vmatprep.subr.mxu0 %v211
    %432 = vmatpush1.msra.mxu0 %v210
    %433 = vmatprep.subr.mxu0 %v214
    %434 = vmatpush1.msra.mxu0 %v213
    %435 = vmatprep.subr.mxu0 %v217
    %436 = vmatpush1.msra.mxu0 %v216
    %437 = vmatprep.subr.mxu0 %v220
    %438 = vmatpush1.msra.mxu0 %v219
    %439 = vmatprep.subr.mxu0 %v223
    %440 = vmatpush1.msra.mxu0 %v222
    %441 = vmatprep.subr.mxu0 %v226
    %442 = vmatpush1.msra.mxu0 %v225
    %443 = vmatprep.subr.mxu0 %v229
    %444 = vmatpush1.msra.mxu0 %v228
    %445 = vmatprep.subr.mxu0 %v232
    %446 = vmatpush1.msra.mxu0 %v231
    %447 = vmatprep.subr.mxu0 %v235
    %448 = vmatpush1.msra.mxu0 %v234
    %449 = vmatprep.subr.mxu0 %v238
    %450 = vmatpush1.msra.mxu0 %v237
    %451 = vmatprep.subr.mxu0 %v241
    %452 = vmatpush1.msra.mxu0 %v240
    %453 = vmatprep.subr.mxu0 %v244
    %454 = vmatpush1.msra.mxu0 %v243
    %455 = vmatprep.subr.mxu0 %v247
    %456 = vmatpush1.msra.mxu0 %v246
    %457 = vmatprep.subr.mxu0 %v250
    %458 = vmatpush1.msra.mxu0 %v249
    %459 = vmatprep.subr.mxu0 %v253
    %460 = vmatpush1.msra.mxu0 %v252
    %461 = vmatprep.mubr.f32.mxu0 %v323
    %462 = vmatmul.mubr.f32.gmra.mrb[0].mxu0 %v61
    %v463 = vpop.f32.mrb[0].mxu0
    %v464 = vadd.f32 %v393, %v463
    %v465 = vpop.f32.mrb[0].mxu0
    %v466 = vadd.f32 %v395, %v465
    %467 = vdwg.mxu0
    %468 = vmatprep.subr.mxu0 %v256
    %469 = vmatpush1.msra.mxu0 %v255
    %470 = vmatprep.subr.mxu0 %v259
    %471 = vmatpush1.msra.mxu0 %v258
    %472 = vmatprep.subr.mxu0 %v262
    %473 = vmatpush1.msra.mxu0 %v261
    %474 = vmatprep.subr.mxu0 %v265
    %475 = vmatpush1.msra.mxu0 %v264
    %476 = vmatprep.subr.mxu0 %v268
    %477 = vmatpush1.msra.mxu0 %v267
    %478 = vmatprep.subr.mxu0 %v271
    %479 = vmatpush1.msra.mxu0 %v270
    %480 = vmatprep.subr.mxu0 %v274
    %481 = vmatpush1.msra.mxu0 %v273
    %482 = vmatprep.subr.mxu0 %v277
    %483 = vmatpush1.msra.mxu0 %v276
    %484 = vmatprep.subr.mxu0 %v280
    %485 = vmatpush1.msra.mxu0 %v279
    %486 = vmatprep.subr.mxu0 %v283
    %487 = vmatpush1.msra.mxu0 %v282
    %488 = vmatprep.subr.mxu0 %v286
    %489 = vmatpush1.msra.mxu0 %v285
    %490 = vmatprep.subr.mxu0 %v289
    %491 = vmatpush1.msra.mxu0 %v288
    %492 = vmatprep.subr.mxu0 %v292
    %493 = vmatpush1.msra.mxu0 %v291
    %494 = vmatprep.subr.mxu0 %v295
    %495 = vmatpush1.msra.mxu0 %v294
    %496 = vmatprep.subr.mxu0 %v298
    %497 = vmatpush1.msra.mxu0 %v297
    %498 = vmatprep.subr.mxu0 %v301
    %499 = vmatpush1.msra.mxu0 %v300
    %500 = vmatprep.subr.mxu0 0.0
    %501 = vmatpush1.msra.mxu0 0.0
    %502 = vmatprep.subr.mxu0 0.0
    %503 = vmatpush1.msra.mxu0 0.0
    %504 = vmatprep.subr.mxu0 0.0
    %505 = vmatpush1.msra.mxu0 0.0
    %506 = vmatprep.subr.mxu0 0.0
    %507 = vmatpush1.msra.mxu0 0.0
    %508 = vmatprep.subr.mxu0 0.0
    %509 = vmatpush1.msra.mxu0 0.0
    %510 = vmatprep.subr.mxu0 0.0
    %511 = vmatpush1.msra.mxu0 0.0
    %512 = vmatprep.subr.mxu0 0.0
    %513 = vmatpush1.msra.mxu0 0.0
    %514 = vmatprep.subr.mxu0 0.0
    %515 = vmatpush1.msra.mxu0 0.0
    %516 = vmatprep.subr.mxu0 0.0
    %517 = vmatpush1.msra.mxu0 0.0
    %518 = vmatprep.subr.mxu0 0.0
    %519 = vmatpush1.msra.mxu0 0.0
    %520 = vmatprep.subr.mxu0 0.0
    %521 = vmatpush1.msra.mxu0 0.0
    %522 = vmatprep.subr.mxu0 0.0
    %523 = vmatpush1.msra.mxu0 0.0
    %524 = vmatprep.subr.mxu0 0.0
    %525 = vmatpush1.msra.mxu0 0.0
    %526 = vmatprep.subr.mxu0 0.0
    %527 = vmatpush1.msra.mxu0 0.0
    %528 = vmatprep.subr.mxu0 0.0
    %529 = vmatpush1.msra.mxu0 0.0
    %530 = vmatprep.subr.mxu0 0.0
    %531 = vmatpush1.msra.mxu0 0.0
    %532 = vmatprep.mubr.f32.mxu0 0.0
    %533 = vmatmul.mubr.f32.gmra.mrb[0].mxu0 %v62
    %v534 = vpop.f32.mrb[0].mxu0
    %v535 = vadd.f32 %v464, %v534
    %v536 = vpop.f32.mrb[0].mxu0
    %v537 = vadd.f32 %v466, %v536
    %538 = vdwg.mxu0
    %539 = vmatprep.subr.mxu0 0.0
    %540 = vmatpush1.msra.mxu0 %v65
    %541 = vmatprep.subr.mxu0 0.0
    %542 = vmatpush1.msra.mxu0 %v68
    %543 = vmatprep.subr.mxu0 0.0
    %544 = vmatpush1.msra.mxu0 %v71
    %545 = vmatprep.subr.mxu0 0.0
    %546 = vmatpush1.msra.mxu0 %v74
    %547 = vmatprep.subr.mxu0 0.0
    %548 = vmatpush1.msra.mxu0 %v77
    %549 = vmatprep.subr.mxu0 0.0
    %550 = vmatpush1.msra.mxu0 %v80
    %551 = vmatprep.subr.mxu0 0.0
    %552 = vmatpush1.msra.mxu0 %v83
    %553 = vmatprep.subr.mxu0 0.0
    %554 = vmatpush1.msra.mxu0 %v86
    %555 = vmatprep.subr.mxu0 0.0
    %556 = vmatpush1.msra.mxu0 %v89
    %557 = vmatprep.subr.mxu0 0.0
    %558 = vmatpush1.msra.mxu0 %v92
    %559 = vmatprep.subr.mxu0 0.0
    %560 = vmatpush1.msra.mxu0 %v95
    %561 = vmatprep.subr.mxu0 0.0
    %562 = vmatpush1.msra.mxu0 %v98
    %563 = vmatprep.subr.mxu0 0.0
    %564 = vmatpush1.msra.mxu0 %v101
    %565 = vmatprep.subr.mxu0 0.0
    %566 = vmatpush1.msra.mxu0 %v104
    %567 = vmatprep.subr.mxu0 0.0
    %568 = vmatpush1.msra.mxu0 %v107
    %569 = vmatprep.subr.mxu0 0.0
    %570 = vmatpush1.msra.mxu0 %v110
    %571 = vmatprep.subr.mxu0 0.0
    %572 = vmatpush1.msra.mxu0 %v113
    %573 = vmatprep.subr.mxu0 0.0
    %574 = vmatpush1.msra.mxu0 %v116
    %575 = vmatprep.subr.mxu0 0.0
    %576 = vmatpush1.msra.mxu0 %v119
    %577 = vmatprep.subr.mxu0 0.0
    %578 = vmatpush1.msra.mxu0 %v122
    %579 = vmatprep.subr.mxu0 0.0
    %580 = vmatpush1.msra.mxu0 %v125
    %581 = vmatprep.subr.mxu0 0.0
    %582 = vmatpush1.msra.mxu0 %v128
    %583 = vmatprep.subr.mxu0 0.0
    %584 = vmatpush1.msra.mxu0 %v131
    %585 = vmatprep.subr.mxu0 0.0
    %586 = vmatpush1.msra.mxu0 %v134
    %587 = vmatprep.subr.mxu0 0.0
    %588 = vmatpush1.msra.mxu0 %v137
    %589 = vmatprep.subr.mxu0 0.0
    %590 = vmatpush1.msra.mxu0 %v140
    %591 = vmatprep.subr.mxu0 0.0
    %592 = vmatpush1.msra.mxu0 %v143
    %593 = vmatprep.subr.mxu0 0.0
    %594 = vmatpush1.msra.mxu0 %v146
    %595 = vmatprep.subr.mxu0 0.0
    %596 = vmatpush1.msra.mxu0 %v149
    %597 = vmatprep.subr.mxu0 0.0
    %598 = vmatpush1.msra.mxu0 %v152
    %599 = vmatprep.subr.mxu0 0.0
    %600 = vmatpush1.msra.mxu0 %v155
    %601 = vmatprep.subr.mxu0 0.0
    %602 = vmatpush1.msra.mxu0 %v158
    %603 = vmatprep.mubr.f32.mxu0 %v322
    %604 = vmatmul.mubr.f32.gmra.mrb[0].mxu0 %v60
    %v605 = vpop.f32.mrb[0].mxu0
    %v606 = vadd.f32 %v316, %v605
    %v607 = vpop.f32.mrb[0].mxu0
    %608 = vdwg.mxu0
    %609 = vmatprep.subr.mxu0 0.0
    %610 = vmatpush1.msra.mxu0 %v161
    %611 = vmatprep.subr.mxu0 0.0
    %612 = vmatpush1.msra.mxu0 %v164
    %613 = vmatprep.subr.mxu0 0.0
    %614 = vmatpush1.msra.mxu0 %v167
    %615 = vmatprep.subr.mxu0 0.0
    %616 = vmatpush1.msra.mxu0 %v170
    %617 = vmatprep.subr.mxu0 0.0
    %618 = vmatpush1.msra.mxu0 %v173
    %619 = vmatprep.subr.mxu0 0.0
    %620 = vmatpush1.msra.mxu0 %v176
    %621 = vmatprep.subr.mxu0 0.0
    %622 = vmatpush1.msra.mxu0 %v179
    %623 = vmatprep.subr.mxu0 0.0
    %624 = vmatpush1.msra.mxu0 %v182
    %625 = vmatprep.subr.mxu0 0.0
    %626 = vmatpush1.msra.mxu0 %v185
    %627 = vmatprep.subr.mxu0 0.0
    %628 = vmatpush1.msra.mxu0 %v188
    %629 = vmatprep.subr.mxu0 0.0
    %630 = vmatpush1.msra.mxu0 %v191
    %631 = vmatprep.subr.mxu0 0.0
    %632 = vmatpush1.msra.mxu0 %v194
    %633 = vmatprep.subr.mxu0 0.0
    %634 = vmatpush1.msra.mxu0 %v197
    %635 = vmatprep.subr.mxu0 0.0
    %636 = vmatpush1.msra.mxu0 %v200
    %637 = vmatprep.subr.mxu0 0.0
    %638 = vmatpush1.msra.mxu0 %v203
    %639 = vmatprep.subr.mxu0 0.0
    %640 = vmatpush1.msra.mxu0 %v206
    %641 = vmatprep.subr.mxu0 0.0
    %642 = vmatpush1.msra.mxu0 %v209
    %643 = vmatprep.subr.mxu0 0.0
    %644 = vmatpush1.msra.mxu0 %v212
    %645 = vmatprep.subr.mxu0 0.0
    %646 = vmatpush1.msra.mxu0 %v215
    %647 = vmatprep.subr.mxu0 0.0
    %648 = vmatpush1.msra.mxu0 %v218
    %649 = vmatprep.subr.mxu0 0.0
    %650 = vmatpush1.msra.mxu0 %v221
    %651 = vmatprep.subr.mxu0 0.0
    %652 = vmatpush1.msra.mxu0 %v224
    %653 = vmatprep.subr.mxu0 0.0
    %654 = vmatpush1.msra.mxu0 %v227
    %655 = vmatprep.subr.mxu0 0.0
    %656 = vmatpush1.msra.mxu0 %v230
    %657 = vmatprep.subr.mxu0 0.0
    %658 = vmatpush1.msra.mxu0 %v233
    %659 = vmatprep.subr.mxu0 0.0
    %660 = vmatpush1.msra.mxu0 %v236
    %661 = vmatprep.subr.mxu0 0.0
    %662 = vmatpush1.msra.mxu0 %v239
    %663 = vmatprep.subr.mxu0 0.0
    %664 = vmatpush1.msra.mxu0 %v242
    %665 = vmatprep.subr.mxu0 0.0
    %666 = vmatpush1.msra.mxu0 %v245
    %667 = vmatprep.subr.mxu0 0.0
    %668 = vmatpush1.msra.mxu0 %v248
    %669 = vmatprep.subr.mxu0 0.0
    %670 = vmatpush1.msra.mxu0 %v251
    %671 = vmatprep.subr.mxu0 0.0
    %672 = vmatpush1.msra.mxu0 %v254
    %673 = vmatprep.mubr.f32.mxu0 %v323
    %674 = vmatmul.mubr.f32.gmra.mrb[0].mxu0 %v61
    %v675 = vpop.f32.mrb[0].mxu0
    %v676 = vadd.f32 %v606, %v675
    %v677 = vpop.f32.mrb[0].mxu0
    %678 = vdwg.mxu0
    %679 = vmatprep.subr.mxu0 0.0
    %680 = vmatpush1.msra.mxu0 %v257
    %681 = vmatprep.subr.mxu0 0.0
    %682 = vmatpush1.msra.mxu0 %v260
    %683 = vmatprep.subr.mxu0 0.0
    %684 = vmatpush1.msra.mxu0 %v263
    %685 = vmatprep.subr.mxu0 0.0
    %686 = vmatpush1.msra.mxu0 %v266
    %687 = vmatprep.subr.mxu0 0.0
    %688 = vmatpush1.msra.mxu0 %v269
    %689 = vmatprep.subr.mxu0 0.0
    %690 = vmatpush1.msra.mxu0 %v272
    %691 = vmatprep.subr.mxu0 0.0
    %692 = vmatpush1.msra.mxu0 %v275
    %693 = vmatprep.subr.mxu0 0.0
    %694 = vmatpush1.msra.mxu0 %v278
    %695 = vmatprep.subr.mxu0 0.0
    %696 = vmatpush1.msra.mxu0 %v281
    %697 = vmatprep.subr.mxu0 0.0
    %698 = vmatpush1.msra.mxu0 %v284
    %699 = vmatprep.subr.mxu0 0.0
    %700 = vmatpush1.msra.mxu0 %v287
    %701 = vmatprep.subr.mxu0 0.0
    %702 = vmatpush1.msra.mxu0 %v290
    %703 = vmatprep.subr.mxu0 0.0
    %704 = vmatpush1.msra.mxu0 %v293
    %705 = vmatprep.subr.mxu0 0.0
    %706 = vmatpush1.msra.mxu0 %v296
    %707 = vmatprep.subr.mxu0 0.0
    %708 = vmatpush1.msra.mxu0 %v299
    %709 = vmatprep.subr.mxu0 0.0
    %710 = vmatpush1.msra.mxu0 %v302
    %711 = vmatprep.subr.mxu0 0.0
    %712 = vmatpush1.msra.mxu0 0.0
    %713 = vmatprep.subr.mxu0 0.0
    %714 = vmatpush1.msra.mxu0 0.0
    %715 = vmatprep.subr.mxu0 0.0
    %716 = vmatpush1.msra.mxu0 0.0
    %717 = vmatprep.subr.mxu0 0.0
    %718 = vmatpush1.msra.mxu0 0.0
    %719 = vmatprep.subr.mxu0 0.0
    %720 = vmatpush1.msra.mxu0 0.0
    %721 = vmatprep.subr.mxu0 0.0
    %722 = vmatpush1.msra.mxu0 0.0
    %723 = vmatprep.subr.mxu0 0.0
    %724 = vmatpush1.msra.mxu0 0.0
    %725 = vmatprep.subr.mxu0 0.0
    %726 = vmatpush1.msra.mxu0 0.0
    %727 = vmatprep.subr.mxu0 0.0
    %728 = vmatpush1.msra.mxu0 0.0
    %729 = vmatprep.subr.mxu0 0.0
    %730 = vmatpush1.msra.mxu0 0.0
    %731 = vmatprep.subr.mxu0 0.0
    %732 = vmatpush1.msra.mxu0 0.0
    %733 = vmatprep.subr.mxu0 0.0
    %734 = vmatpush1.msra.mxu0 0.0
    %735 = vmatprep.subr.mxu0 0.0
    %736 = vmatpush1.msra.mxu0 0.0
    %737 = vmatprep.subr.mxu0 0.0
    %738 = vmatpush1.msra.mxu0 0.0
    %739 = vmatprep.subr.mxu0 0.0
    %740 = vmatpush1.msra.mxu0 0.0
    %741 = vmatprep.subr.mxu0 0.0
    %742 = vmatpush1.msra.mxu0 0.0
    %743 = vmatprep.mubr.f32.mxu0 0.0
    %744 = vmatmul.mubr.f32.gmra.mrb[0].mxu0 %v62
    %v745 = vpop.f32.mrb[0].mxu0
    %v746 = vadd.f32 %v676, %v745
    %v747 = vpop.f32.mrb[0].mxu0
    %748 = vdwg.mxu0
    %v749 = vmax.f32 %v535, 0.0
    %v750 = vmax.f32 %v537, 0.0
    %v751 = vmax.f32 %v746, 0.0
    %v752 = vld [vmem:[#allocation7] sm:$0xff]
    %v753 = vld [vmem:[#allocation7 + $0x8] sm:$0xff]
    %v754 = vld [vmem:[#allocation7 + $0x10] sm:$0xff]
    %v755 = vld [vmem:[#allocation7 + $0x18] sm:$0xff]
    %v756 = vld [vmem:[#allocation7 + $0x20] sm:$0xff]
    %v757 = vld [vmem:[#allocation7 + $0x28] sm:$0xff]
    %v758 = vld [vmem:[#allocation7 + $0x30] sm:$0xff]
    %v759 = vld [vmem:[#allocation7 + $0x38] sm:$0xff]
    %v760 = vld [vmem:[#allocation7 + $0x40] sm:$0xff]
    %v761 = vld [vmem:[#allocation7 + $0x48] sm:$0xff]
    %v762 = vld [vmem:[#allocation7 + $0x50] sm:$0xff]
    %v763 = vld [vmem:[#allocation7 + $0x58] sm:$0xff]
    %v764 = vld [vmem:[#allocation7 + $0x60] sm:$0xff]
    %v765 = vld [vmem:[#allocation7 + $0x68] sm:$0xff]
    %v766 = vld [vmem:[#allocation7 + $0x70] sm:$0xff]
    %v767 = vld [vmem:[#allocation7 + $0x78] sm:$0xff]
    %v768 = vld [vmem:[#allocation7 + $0x80] sm:$0xff]
    %v769 = vld [vmem:[#allocation7 + $0x88] sm:$0xff]
    %v770 = vld [vmem:[#allocation7 + $0x90] sm:$0xff]
    %v771 = vld [vmem:[#allocation7 + $0x98] sm:$0xff]
    %v772 = vld [vmem:[#allocation7 + $0xa0] sm:$0xff]
    %v773 = vld [vmem:[#allocation7 + $0xa8] sm:$0xff]
    %v774 = vld [vmem:[#allocation7 + $0xb0] sm:$0xff]
    %v775 = vld [vmem:[#allocation7 + $0xb8] sm:$0xff]
    %v776 = vld [vmem:[#allocation7 + $0xc0] sm:$0xff]
    %v777 = vld [vmem:[#allocation7 + $0xc8] sm:$0xff]
    %v778 = vld [vmem:[#allocation7 + $0xd0] sm:$0xff]
    %v779 = vld [vmem:[#allocation7 + $0xd8] sm:$0xff]
    %v780 = vld [vmem:[#allocation7 + $0xe0] sm:$0xff]
    %v781 = vld [vmem:[#allocation7 + $0xe8] sm:$0xff]
    %v782 = vld [vmem:[#allocation7 + $0xf0] sm:$0xff]
    %v783 = vld [vmem:[#allocation7 + $0xf8] sm:$0xff]
    %v784 = vld [vmem:[#allocation7 + $0x100] sm:$0xff]
    %v785 = vld [vmem:[#allocation7 + $0x108] sm:$0xff]
    %v786 = vld [vmem:[#allocation7 + $0x110] sm:$0xff]
    %v787 = vld [vmem:[#allocation7 + $0x118] sm:$0xff]
    %v788 = vld [vmem:[#allocation7 + $0x120] sm:$0xff]
    %v789 = vld [vmem:[#allocation7 + $0x128] sm:$0xff]
    %v790 = vld [vmem:[#allocation7 + $0x130] sm:$0xff]
    %v791 = vld [vmem:[#allocation7 + $0x138] sm:$0xff]
    %v792 = vld [vmem:[#allocation7 + $0x140] sm:$0xff]
    %v793 = vld [vmem:[#allocation7 + $0x148] sm:$0xff]
    %v794 = vld [vmem:[#allocation7 + $0x150] sm:$0xff]
    %v795 = vld [vmem:[#allocation7 + $0x158] sm:$0xff]
    %v796 = vld [vmem:[#allocation7 + $0x160] sm:$0xff]
    %v797 = vld [vmem:[#allocation7 + $0x168] sm:$0xff]
    %v798 = vld [vmem:[#allocation7 + $0x170] sm:$0xff]
    %v799 = vld [vmem:[#allocation7 + $0x178] sm:$0xff]
    %v800 = vld [vmem:[%s4] sm:$0x1]
    %v802 = vlaneseq
    %v803 = vshrl.u32 %v802, 7
    %v804 = vsub.s32 0, %v803
    %v805 = vrot.slane %v800, %v804
    %807 = vmatprep.subr.mxu0 0.0
    %808 = vmatpush1.msra.mxu0 %v752
    %809 = vmatprep.subr.mxu0 0.0
    %810 = vmatpush1.msra.mxu0 %v753
    %811 = vmatprep.subr.mxu0 0.0
    %812 = vmatpush1.msra.mxu0 %v754
    %813 = vmatprep.subr.mxu0 0.0
    %814 = vmatpush1.msra.mxu0 %v755
    %815 = vmatprep.subr.mxu0 0.0
    %816 = vmatpush1.msra.mxu0 %v756
    %817 = vmatprep.subr.mxu0 0.0
    %818 = vmatpush1.msra.mxu0 %v757
    %819 = vmatprep.subr.mxu0 0.0
    %820 = vmatpush1.msra.mxu0 %v758
    %821 = vmatprep.subr.mxu0 0.0
    %822 = vmatpush1.msra.mxu0 %v759
    %823 = vmatprep.subr.mxu0 0.0
    %824 = vmatpush1.msra.mxu0 %v760
    %825 = vmatprep.subr.mxu0 0.0
    %826 = vmatpush1.msra.mxu0 %v761
    %827 = vmatprep.subr.mxu0 0.0
    %828 = vmatpush1.msra.mxu0 %v762
    %829 = vmatprep.subr.mxu0 0.0
    %830 = vmatpush1.msra.mxu0 %v763
    %831 = vmatprep.subr.mxu0 0.0
    %832 = vmatpush1.msra.mxu0 %v764
    %833 = vmatprep.subr.mxu0 0.0
    %834 = vmatpush1.msra.mxu0 %v765
    %835 = vmatprep.subr.mxu0 0.0
    %836 = vmatpush1.msra.mxu0 %v766
    %837 = vmatprep.subr.mxu0 0.0
    %838 = vmatpush1.msra.mxu0 %v767
    %839 = vmatprep.subr.mxu0 0.0
    %840 = vmatpush1.msra.mxu0 %v768
    %841 = vmatprep.subr.mxu0 0.0
    %842 = vmatpush1.msra.mxu0 %v769
    %843 = vmatprep.subr.mxu0 0.0
    %844 = vmatpush1.msra.mxu0 %v770
    %845 = vmatprep.subr.mxu0 0.0
    %846 = vmatpush1.msra.mxu0 %v771
    %847 = vmatprep.subr.mxu0 0.0
    %848 = vmatpush1.msra.mxu0 %v772
    %849 = vmatprep.subr.mxu0 0.0
    %850 = vmatpush1.msra.mxu0 %v773
    %851 = vmatprep.subr.mxu0 0.0
    %852 = vmatpush1.msra.mxu0 %v774
    %853 = vmatprep.subr.mxu0 0.0
    %854 = vmatpush1.msra.mxu0 %v775
    %855 = vmatprep.subr.mxu0 0.0
    %856 = vmatpush1.msra.mxu0 %v776
    %857 = vmatprep.subr.mxu0 0.0
    %858 = vmatpush1.msra.mxu0 %v777
    %859 = vmatprep.subr.mxu0 0.0
    %860 = vmatpush1.msra.mxu0 %v778
    %861 = vmatprep.subr.mxu0 0.0
    %862 = vmatpush1.msra.mxu0 %v779
    %863 = vmatprep.subr.mxu0 0.0
    %864 = vmatpush1.msra.mxu0 %v780
    %865 = vmatprep.subr.mxu0 0.0
    %866 = vmatpush1.msra.mxu0 %v781
    %867 = vmatprep.subr.mxu0 0.0
    %868 = vmatpush1.msra.mxu0 %v782
    %869 = vmatprep.subr.mxu0 0.0
    %870 = vmatpush1.msra.mxu0 %v783
    %871 = vmatprep.mubr.f32.mxu0 %v750
    %872 = vmatmul.mubr.f32.gmra.mrb[0].mxu0 %v749
    %v873 = vpop.f32.mrb[0].mxu0
    %v874 = vadd.f32 %v805, %v873
    %v875 = vpop.f32.mrb[0].mxu0
    %876 = vdwg.mxu0
    %877 = vmatprep.subr.mxu0 0.0
    %878 = vmatpush1.msra.mxu0 %v784
    %879 = vmatprep.subr.mxu0 0.0
    %880 = vmatpush1.msra.mxu0 %v785
    %881 = vmatprep.subr.mxu0 0.0
    %882 = vmatpush1.msra.mxu0 %v786
    %883 = vmatprep.subr.mxu0 0.0
    %884 = vmatpush1.msra.mxu0 %v787
    %885 = vmatprep.subr.mxu0 0.0
    %886 = vmatpush1.msra.mxu0 %v788
    %887 = vmatprep.subr.mxu0 0.0
    %888 = vmatpush1.msra.mxu0 %v789
    %889 = vmatprep.subr.mxu0 0.0
    %890 = vmatpush1.msra.mxu0 %v790
    %891 = vmatprep.subr.mxu0 0.0
    %892 = vmatpush1.msra.mxu0 %v791
    %893 = vmatprep.subr.mxu0 0.0
    %894 = vmatpush1.msra.mxu0 %v792
    %895 = vmatprep.subr.mxu0 0.0
    %896 = vmatpush1.msra.mxu0 %v793
    %897 = vmatprep.subr.mxu0 0.0
    %898 = vmatpush1.msra.mxu0 %v794
    %899 = vmatprep.subr.mxu0 0.0
    %900 = vmatpush1.msra.mxu0 %v795
    %901 = vmatprep.subr.mxu0 0.0
    %902 = vmatpush1.msra.mxu0 %v796
    %903 = vmatprep.subr.mxu0 0.0
    %904 = vmatpush1.msra.mxu0 %v797
    %905 = vmatprep.subr.mxu0 0.0
    %906 = vmatpush1.msra.mxu0 %v798
    %907 = vmatprep.subr.mxu0 0.0
    %908 = vmatpush1.msra.mxu0 %v799
    %909 = vmatprep.subr.mxu0 0.0
    %910 = vmatpush1.msra.mxu0 0.0
    %911 = vmatprep.subr.mxu0 0.0
    %912 = vmatpush1.msra.mxu0 0.0
    %913 = vmatprep.subr.mxu0 0.0
    %914 = vmatpush1.msra.mxu0 0.0
    %915 = vmatprep.subr.mxu0 0.0
    %916 = vmatpush1.msra.mxu0 0.0
    %917 = vmatprep.subr.mxu0 0.0
    %918 = vmatpush1.msra.mxu0 0.0
    %919 = vmatprep.subr.mxu0 0.0
    %920 = vmatpush1.msra.mxu0 0.0
    %921 = vmatprep.subr.mxu0 0.0
    %922 = vmatpush1.msra.mxu0 0.0
    %923 = vmatprep.subr.mxu0 0.0
    %924 = vmatpush1.msra.mxu0 0.0
    %925 = vmatprep.subr.mxu0 0.0
    %926 = vmatpush1.msra.mxu0 0.0
    %927 = vmatprep.subr.mxu0 0.0
    %928 = vmatpush1.msra.mxu0 0.0
    %929 = vmatprep.subr.mxu0 0.0
    %930 = vmatpush1.msra.mxu0 0.0
    %931 = vmatprep.subr.mxu0 0.0
    %932 = vmatpush1.msra.mxu0 0.0
    %933 = vmatprep.subr.mxu0 0.0
    %934 = vmatpush1.msra.mxu0 0.0
    %935 = vmatprep.subr.mxu0 0.0
    %936 = vmatpush1.msra.mxu0 0.0
    %937 = vmatprep.subr.mxu0 0.0
    %938 = vmatpush1.msra.mxu0 0.0
    %939 = vmatprep.subr.mxu0 0.0
    %940 = vmatpush1.msra.mxu0 0.0
    %941 = vmatprep.mubr.f32.mxu0 0.0
    %942 = vmatmul.mubr.f32.gmra.mrb[0].mxu0 %v751
    %v943 = vpop.f32.mrb[0].mxu0
    %v944 = vadd.f32 %v874, %v943
    %v945 = vpop.f32.mrb[0].mxu0
    %946 = vdwg.mxu0
    %947 = vst [vmem:[#allocation8] sm:$0xf] %v944
    // Predicated region
    $region34: #{tpu_custom_call.1} parent=1 // pred_check
      _
    $region35: #{tpu_custom_call.1} parent=1 // pred_check_branch
      %949 = sbr.rel (0) target = $region37
    $region36: #{tpu_custom_call.1} parent=1 // pred_region
      %s951 = ssub.s32 64, 64
      %952 = vsyncadd [#allocation4], %s951
      %s954 = sshll.u32 [#allocation8], 4
      %s955 = int_to_ptr.vmem [resolvable:$true] %s954
      %957 = dma.vmem_to_hbm [thread:$0]  %s955, 64, %s5, [#allocation4]
    $region37: #{tpu_custom_call.1} parent=1 // pred_fallthru
      _
    // Predicated region
    $region38: #{tpu_custom_call.1} parent=1 // pred_check
      _
    $region39: #{tpu_custom_call.1} parent=1 // pred_check_branch
      %959 = sbr.rel (0) target = $region41
    $region40: #{tpu_custom_call.1} parent=1 // pred_region
      %960 = dma.done [#allocation4], 64
    $region41: #{tpu_custom_call.1} parent=1 // pred_fallthru
      _
    %961 = vsyncpa [#allocation3], 1
    %962 = vsyncpa [#allocation6], 1
    %963 = vsyncpa [#allocation4], 1

</llo_original>
